<compile_context>
chip_gen: v7x
topology: tpu7x:2x2x1
jax: 0.10.0
libtpu: 0.0.40
codegen_flags: <defaults>
</compile_context>

<pallas_src>
import jax
import jax.numpy as jnp
from jax.experimental import pallas as pl
from jax.experimental.pallas import tpu as pltpu


def _round_up(x, m):
    return ((x + m - 1) // m) * m


def _vmem_budget_bytes():
    """~75% of physical VMEM for the running generation (safe headroom)."""
    cap = None
    try:
        info = pltpu.get_tpu_info()
        cap = getattr(info, "vmem_capacity_bytes", None)
    except Exception:
        cap = None
    if not cap:
        cap = 64 << 20  # conservative fallback (v7x-sized)
    return int(cap * 3 // 4)


# ---------------------------------------------------------------------------
# Small path: everything in one kernel invocation (overhead-bound regime).
# ---------------------------------------------------------------------------
def _decoder_small_kernel(emb_ref, w_ref, b_ref, ops_ref, adj_ref):
    # emb_ref: (B, N, E)  w_ref: (E, IN)  b_ref: (1, IN)
    # ops_ref: (B, N, IN) adj_ref: (B, N, N)
    e = emb_ref[...]
    B, N, E = e.shape

    # ops: one flattened matmul (E stays the lane/contraction dim).
    ops = jnp.dot(e.reshape(B * N, E), w_ref[...],
                  preferred_element_type=jnp.float32) + b_ref[...]
    ops_ref[...] = jax.nn.sigmoid(ops).reshape(B, N, -1).astype(ops_ref.dtype)

    # adj: one batched dot_general, contraction on E, batch on B (no .T).
    adj = jax.lax.dot_general(
        e, e,
        dimension_numbers=(((2,), (2,)), ((0,), (0,))),
        preferred_element_type=jnp.float32,
    )
    adj_ref[...] = jax.nn.sigmoid(adj).astype(adj_ref.dtype)


def _decoder_small(embedding, w_t, b2d, out_dtype):
    B, N, E = embedding.shape
    IN = w_t.shape[1]
    itemsize = embedding.dtype.itemsize
    raw_bytes = itemsize * (B * N * E + E * IN + IN + B * N * IN + B * N * N)
    budget = _vmem_budget_bytes()
    vmem_limit = int(min(max(4 * raw_bytes, 8 << 20), budget))

    out_shapes = (
        jax.ShapeDtypeStruct((B, N, IN), out_dtype),
        jax.ShapeDtypeStruct((B, N, N), out_dtype),
    )
    grid_spec = pltpu.PrefetchScalarGridSpec(
        num_scalar_prefetch=0,
        grid=(1,),
        in_specs=[
            pl.BlockSpec((B, N, E), lambda g: (0, 0, 0)),
            pl.BlockSpec((E, IN), lambda g: (0, 0)),
            pl.BlockSpec((1, IN), lambda g: (0, 0)),
        ],
        out_specs=[
            pl.BlockSpec((B, N, IN), lambda g: (0, 0, 0)),
            pl.BlockSpec((B, N, N), lambda g: (0, 0, 0)),
        ],
    )
    return pl.pallas_call(
        _decoder_small_kernel,
        out_shape=out_shapes,
        grid_spec=grid_spec,
        compiler_params=pltpu.CompilerParams(
            dimension_semantics=("arbitrary",),
            vmem_limit_bytes=vmem_limit,
        ),
    )(embedding, w_t, b2d)


# ---------------------------------------------------------------------------
# Tiled path: adj tiled over N; the (N, N) block is never held in VMEM.
# ---------------------------------------------------------------------------
def _tiled_vmem_need(tile, E, IN, itemsize):
    need = 2 * tile * tile * itemsize          # adj tile (double-buffered)
    need += 2 * 2 * tile * E * itemsize        # row + col embedding tiles
    need += 2 * tile * IN * itemsize           # ops tile
    need += 2 * (E * IN + IN) * itemsize       # weight + bias
    return need


def _choose_tile(N, E, IN, itemsize, budget):
    """Largest VMEM-fitting tile, then split to minimize boundary waste."""
    Np128 = _round_up(N, 128)
    cap_limit = min(2048, Np128)               # >2048 is diminishing returns
    cap = 128
    t = cap_limit
    while t >= 128:
        if _tiled_vmem_need(t, E, IN, itemsize) * 5 // 4 + (2 << 20) <= budget:
            cap = t
            break
        t -= 128
    # Split round_up(N, 128) as evenly as possible across cdiv(Np128, cap)
    # tiles so awkward N (e.g. 700) doesn't inflate the written adj area.
    nt = -(-Np128 // cap)
    tile = _round_up(-(-Np128 // nt), 128)
    return tile


def _decoder_tiled_kernel(emb_i_ref, emb_j_ref, w_ref, b_ref, ops_ref, adj_ref):
    # emb_i_ref: (1, T, E) row tile (indexed by i)
    # emb_j_ref: (1, T, E) col tile (indexed by j)
    # ops_ref:   (1, T, IN)   adj_ref: (1, T, T)
    ei = emb_i_ref[0]
    ej = emb_j_ref[0]

    # adj tile = ei @ ej^T via a contraction on E -> straight to the MXU,
    # no XLU transpose / relayout copy.
    adj = jax.lax.dot_general(
        ei, ej,
        dimension_numbers=(((1,), (1,)), ((), ())),
        preferred_element_type=jnp.float32,
    )
    # sigmoid(x) = 1 / (1 + exp(-x)); approx reciprocal keeps the single EUP
    # off the critical path when the tile writeback shrinks (v7x bandwidth).
    sig = pl.reciprocal(1.0 + jnp.exp(-adj), approx=True)
    adj_ref[0] = sig.astype(adj_ref.dtype)

    # ops depends only on the row tile: compute it once per (b, i), on the
    # first column step.  Its output block is resident across the j axis.
    @pl.when(pl.program_id(2) == 0)
    def _():
        ops = (
            jnp.dot(ei, w_ref[...], preferred_element_type=jnp.float32)
            + b_ref[...]
        )
        ops_ref[0] = jax.nn.sigmoid(ops).astype(ops_ref.dtype)


def _decoder_tiled(embedding, w_t, b2d, out_dtype, tile=None):
    B, N, E = embedding.shape
    IN = w_t.shape[1]
    itemsize = embedding.dtype.itemsize
    budget = _vmem_budget_bytes()

    if tile is None:
        tile = _choose_tile(N, E, IN, itemsize, budget)
    assert tile % 128 == 0, "adj tile must satisfy the (8, 128) constraint"
    nt = -(-N // tile)

    # Explicit VMEM limit from the chosen tile sizes, capped at ~75% of the
    # physical VMEM of the running generation.
    need = _tiled_vmem_need(tile, E, IN, itemsize)
    vmem_limit = int(min(max(need * 5 // 4 + (2 << 20), 16 << 20), budget))

    # Outputs at their natural shapes: ragged boundary tiles are handled by
    # Pallas output masking (no input pad copy, no post-call slice copy).
    out_shapes = (
        jax.ShapeDtypeStruct((B, N, IN), out_dtype),
        jax.ShapeDtypeStruct((B, N, N), out_dtype),
    )
    grid_spec = pltpu.PrefetchScalarGridSpec(
        num_scalar_prefetch=0,
        grid=(B, nt, nt),
        in_specs=[
            pl.BlockSpec((1, tile, E), lambda b, i, j: (b, i, 0)),   # row tile
            pl.BlockSpec((1, tile, E), lambda b, i, j: (b, j, 0)),   # col tile
            pl.BlockSpec((E, IN), lambda b, i, j: (0, 0)),
            pl.BlockSpec((1, IN), lambda b, i, j: (0, 0)),
        ],
        out_specs=[
            pl.BlockSpec((1, tile, IN), lambda b, i, j: (b, i, 0)),
            pl.BlockSpec((1, tile, tile), lambda b, i, j: (b, i, j)),
        ],
    )
    ops, adj = pl.pallas_call(
        _decoder_tiled_kernel,
        out_shape=out_shapes,
        grid_spec=grid_spec,
        compiler_params=pltpu.CompilerParams(
            # batch and row-tile axes are parallel (megacore sharding even
            # when B is small/odd); the col-tile axis is 'arbitrary' because
            # the ops output block is resident across it.
            dimension_semantics=("parallel", "parallel", "arbitrary"),
            vmem_limit_bytes=vmem_limit,
        ),
    )(embedding, embedding, w_t, b2d)
    return ops, adj


def decoder_forward(embedding, weight, bias, force_tiled=False, tile=None,
                    out_dtype=None):
    """embedding: (B, N, E); weight: (input_dim, E) [PyTorch layout]; bias: (input_dim,).

    out_dtype (optional): emit ops/adj in a narrower dtype (e.g. bfloat16) to
    halve the dominant adj HBM writeback; defaults to embedding.dtype.
    """
    B, N, E = embedding.shape
    IN = weight.shape[0]
    w_t = weight.T                    # (E, IN): row-major matmul on the MXU
    b2d = bias.reshape(1, IN)
    if out_dtype is None:
        out_dtype = embedding.dtype

    itemsize = embedding.dtype.itemsize
    raw_bytes = itemsize * (B * N * E + B * N * N + B * N * IN + E * IN + IN)
    small = (not force_tiled) and B <= 16 and N <= 512 and raw_bytes <= (4 << 20)
    if small:
        return _decoder_small(embedding, w_t, b2d, out_dtype)
    return _decoder_tiled(embedding, w_t, b2d, out_dtype, tile=tile)


def decoder_reference(embedding, weight, bias):
    ops = jnp.einsum("bne,oe->bno", embedding, weight) + bias
    adj = jnp.einsum("bne,bme->bnm", embedding, embedding)
    return jax.nn.sigmoid(ops), jax.nn.sigmoid(adj)


if __name__ == "__main__":
    # arch2vec-scale shapes: batch=2, nodes=8, embedding_dim=16, input_dim=8.
    B, N, E, IN = 2, 8, 16, 8

    key = jax.random.PRNGKey(0)
    k_emb, k_w, k_b = jax.random.split(key, 3)

    embedding = jax.random.normal(k_emb, (B, N, E), dtype=jnp.float32)
    bound = 1.0 / jnp.sqrt(E)
    weight = jax.random.uniform(k_w, (IN, E), minval=-bound, maxval=bound,
                                dtype=jnp.float32)
    bias = jax.random.uniform(k_b, (IN,), minval=-bound, maxval=bound,
                              dtype=jnp.float32)

    # Small (single-invocation) path: exact sigmoid -> tight tolerance.
    ops, adj = decoder_forward(embedding, weight, bias)
    jax.block_until_ready((ops, adj))
    ops_ref, adj_ref = decoder_reference(embedding, weight, bias)
    assert ops.shape == (B, N, IN) and adj.shape == (B, N, N)
    assert jnp.allclose(ops, ops_ref, atol=1e-5, rtol=1e-5)
    assert jnp.allclose(adj, adj_ref, atol=1e-5, rtol=1e-5)

    # Tiled path with ragged N (boundary-masked tiles) and the j==0-gated
    # ops write.  adj uses an approximate-reciprocal sigmoid -> looser tol.
    N2 = 200
    emb2 = jax.random.normal(jax.random.PRNGKey(1), (B, N2, E), dtype=jnp.float32)
    ops2, adj2 = decoder_forward(emb2, weight, bias, force_tiled=True, tile=128)
    jax.block_until_ready((ops2, adj2))
    ops2_ref, adj2_ref = decoder_reference(emb2, weight, bias)
    assert ops2.shape == (B, N2, IN) and adj2.shape == (B, N2, N2)
    assert jnp.allclose(ops2, ops2_ref, atol=1e-5, rtol=1e-5)
    assert jnp.allclose(adj2, adj2_ref, atol=5e-3, rtol=5e-3)

    # Tiled path with the VMEM-derived automatic tile choice.
    N3 = 384
    emb3 = jax.random.normal(jax.random.PRNGKey(2), (B, N3, E), dtype=jnp.float32)
    ops3, adj3 = decoder_forward(emb3, weight, bias, force_tiled=True)
    jax.block_until_ready((ops3, adj3))
    ops3_ref, adj3_ref = decoder_reference(emb3, weight, bias)
    assert ops3.shape == (B, N3, IN) and adj3.shape == (B, N3, N3)
    assert jnp.allclose(ops3, ops3_ref, atol=1e-5, rtol=1e-5)
    assert jnp.allclose(adj3, adj3_ref, atol=5e-3, rtol=5e-3)

    print("KERNEL_OK")
</pallas_src>

<mosaic_0001>
module attributes {stable_mosaic.version = 11 : i64} {
  func.func @_decoder_small_kernel(%arg0: i32, %arg1: memref<2x8x16xf32, #tpu.memory_space<vmem>>, %arg2: memref<16x8xf32, #tpu.memory_space<vmem>>, %arg3: memref<1x8xf32, #tpu.memory_space<vmem>>, %arg4: memref<2x8x8xf32, #tpu.memory_space<vmem>>, %arg5: memref<2x8x8xf32, #tpu.memory_space<vmem>>) attributes {dimension_semantics = [#tpu.dimension_semantics<arbitrary>], iteration_bounds = array<i64: 1>, scalar_prefetch = 0 : i64, scratch_operands = 0 : i64, tpu.core_type = #tpu.core_type<tc>, window_params = [{pipeline_mode = #tpu.pipeline_mode<synchronous>, transform_indices = @transform_0, window_bounds = array<i64: 2, 8, 16>}, {pipeline_mode = #tpu.pipeline_mode<synchronous>, transform_indices = @transform_1, window_bounds = array<i64: 16, 8>}, {pipeline_mode = #tpu.pipeline_mode<synchronous>, transform_indices = @transform_2, window_bounds = array<i64: 1, 8>}, {pipeline_mode = #tpu.pipeline_mode<synchronous>, transform_indices = @transform_3, window_bounds = array<i64: 2, 8, 8>}, {pipeline_mode = #tpu.pipeline_mode<synchronous>, transform_indices = @transform_4, window_bounds = array<i64: 2, 8, 8>}]} {
    %c0 = arith.constant 0 : index
    %c0_0 = arith.constant 0 : index
    %c0_1 = arith.constant 0 : index
    %0 = vector.load %arg1[%c0, %c0_0, %c0_1] : memref<2x8x16xf32, #tpu.memory_space<vmem>>, vector<2x8x16xf32>
    %1 = vector.shape_cast %0 : vector<2x8x16xf32> to vector<16x16xf32>
    %c0_2 = arith.constant 0 : index
    %c0_3 = arith.constant 0 : index
    %2 = vector.load %arg2[%c0_2, %c0_3] : memref<16x8xf32, #tpu.memory_space<vmem>>, vector<16x8xf32>
    %cst = arith.constant dense<0.000000e+00> : vector<16x8xf32>
    %3 = tpu.matmul %1, %2, %cst {dimension_numbers = #tpu.dot_dimension_numbers<[1], [0], [0], [1], [0, 0, 1, 1], [], []>} : vector<16x16xf32>, vector<16x8xf32>, vector<16x8xf32> -> vector<16x8xf32>
    %c0_4 = arith.constant 0 : index
    %c0_5 = arith.constant 0 : index
    %4 = vector.load %arg3[%c0_4, %c0_5] : memref<1x8xf32, #tpu.memory_space<vmem>>, vector<1x8xf32>
    %5 = vector.broadcast %4 : vector<1x8xf32> to vector<16x8xf32>
    %6 = arith.addf %3, %5 : vector<16x8xf32>
    %7 = arith.negf %6 : vector<16x8xf32>
    %8 = math.exp %7 : vector<16x8xf32>
    %cst_6 = arith.constant 1.000000e+00 : f32
    %9 = vector.broadcast %cst_6 : f32 to vector<16x8xf32>
    %10 = arith.addf %9, %8 : vector<16x8xf32>
    %11 = arith.divf %9, %10 : vector<16x8xf32>
    %12 = vector.shape_cast %11 : vector<16x8xf32> to vector<2x8x8xf32>
    %c0_7 = arith.constant 0 : index
    %c0_8 = arith.constant 0 : index
    %c0_9 = arith.constant 0 : index
    %13 = vector.load %arg4[%c0_7, %c0_8, %c0_9] : memref<2x8x8xf32, #tpu.memory_space<vmem>>, vector<2x8x8xf32>
    tpu.vector_store %arg4[%c0_7, %c0_8, %c0_9], %12 {strides = array<i32>} : memref<2x8x8xf32, #tpu.memory_space<vmem>>, vector<2x8x8xf32>,
    %cst_10 = arith.constant dense<0.000000e+00> : vector<2x8x8xf32>
    %14 = tpu.matmul %0, %0, %cst_10 {dimension_numbers = #tpu.dot_dimension_numbers<[2], [2], [1], [1], [0, 0, 0, 1, 1, 1], [0], [0]>} : vector<2x8x16xf32>, vector<2x8x16xf32>, vector<2x8x8xf32> -> vector<2x8x8xf32>
    %15 = arith.negf %14 : vector<2x8x8xf32>
    %16 = math.exp %15 : vector<2x8x8xf32>
    %cst_11 = arith.constant 1.000000e+00 : f32
    %17 = vector.broadcast %cst_11 : f32 to vector<2x8x8xf32>
    %18 = arith.addf %17, %16 : vector<2x8x8xf32>
    %19 = arith.divf %17, %18 : vector<2x8x8xf32>
    %c0_12 = arith.constant 0 : index
    %c0_13 = arith.constant 0 : index
    %c0_14 = arith.constant 0 : index
    %20 = vector.load %arg5[%c0_12, %c0_13, %c0_14] : memref<2x8x8xf32, #tpu.memory_space<vmem>>, vector<2x8x8xf32>
    tpu.vector_store %arg5[%c0_12, %c0_13, %c0_14], %19 {strides = array<i32>} : memref<2x8x8xf32, #tpu.memory_space<vmem>>, vector<2x8x8xf32>,
    return
  }
  func.func @transform_0(%arg0: i32) -> (i32, i32, i32) {
    %c0_i32 = arith.constant 0 : i32
    %c0_i32_0 = arith.constant 0 : i32
    %c0_i32_1 = arith.constant 0 : i32
    %c0_i32_2 = arith.constant 0 : i32
    return %c0_i32, %c0_i32_0, %c0_i32_1 : i32, i32, i32
  }
  func.func @transform_1(%arg0: i32) -> (i32, i32) {
    %c0_i32 = arith.constant 0 : i32
    %c0_i32_0 = arith.constant 0 : i32
    %c0_i32_1 = arith.constant 0 : i32
    return %c0_i32, %c0_i32_0 : i32, i32
  }
  func.func @transform_2(%arg0: i32) -> (i32, i32) {
    %c0_i32 = arith.constant 0 : i32
    %c0_i32_0 = arith.constant 0 : i32
    %c0_i32_1 = arith.constant 0 : i32
    return %c0_i32, %c0_i32_0 : i32, i32
  }
  func.func @transform_3(%arg0: i32) -> (i32, i32, i32) {
    %c0_i32 = arith.constant 0 : i32
    %c0_i32_0 = arith.constant 0 : i32
    %c0_i32_1 = arith.constant 0 : i32
    %c0_i32_2 = arith.constant 0 : i32
    return %c0_i32, %c0_i32_0, %c0_i32_1 : i32, i32, i32
  }
  func.func @transform_4(%arg0: i32) -> (i32, i32, i32) {
    %c0_i32 = arith.constant 0 : i32
    %c0_i32_0 = arith.constant 0 : i32
    %c0_i32_1 = arith.constant 0 : i32
    %c0_i32_2 = arith.constant 0 : i32
    return %c0_i32, %c0_i32_0, %c0_i32_1 : i32, i32, i32
  }
}

</mosaic_0001>

<llo_original>
// kernel: tpu_custom_call.1
$region0: #{tpu_custom_call.1}
  #allocation0 [shape = 'u32[]', space=smem, size = 0x4, offset = 0x4, fixed_abs, tag = 'smem constant byte address 0x4 - core index']
  #allocation1 [shape = 'u32[144,128]{1,0:T(1,128)}', space=vmem, size = 0x12000, scoped, tag = 'internal scratch']
  %s0 = inlined_call_operand.vmem [shape: f32[2,8,16], index: 0, kind: input, shape index: {}]
  %s1 = inlined_call_operand.vmem [shape: f32[16,8], index: 1, kind: input, shape index: {}]
  %s2 = inlined_call_operand.vmem [shape: f32[1,8], index: 2, kind: input, shape index: {}]
  %s3 = inlined_call_operand.hbm [shape: f32[2,8,8], index: 3, kind: output, shape index: {0}]
  %s4 = inlined_call_operand.hbm [shape: f32[2,8,8], index: 4, kind: output, shape index: {1}]
  %5 = xla_tuple %s3, %s4
  %s6 = sld [smem:[#allocation0]]
  $region30: #{tpu_custom_call.1} parent=0
    _
  %s8 = ssub.s32 1, %s6
  %s9 = scalar_select 0, %s8, %s6
  $region1: #{tpu_custom_call.1} parent=0
    #allocation2 [shape = 'u8[8192]{0}', space=vmem, size = 0x2000, scoped, tag = 'output window, operand 0, single buffered']
    #allocation3 [shape = 's32[1]{0}', space=sflag, size = 0x4, scoped, tag = 'scoped memory for tpu_custom_call.1']
    #allocation4 [shape = 'u8[8192]{0}', space=vmem, size = 0x2000, scoped, tag = 'output window, operand 1, single buffered']
    #allocation5 [shape = 's32[1]{0}', space=sflag, size = 0x4, scoped, tag = 'scoped memory for tpu_custom_call.1']
    %10 = vsyncpa [#allocation3], 0
    %11 = vsyncpa [#allocation5], 0
    // Predicated region
    $region2: #{tpu_custom_call.1} parent=1 // pred_check
      _
    $region3: #{tpu_custom_call.1} parent=1 // pred_check_branch
      %13 = sbr.rel (0) target = $region5
    $region4: #{tpu_custom_call.1} parent=1 // pred_region
      _
    $region5: #{tpu_custom_call.1} parent=1 // pred_fallthru
      _
    // Predicated region
    $region6: #{tpu_custom_call.1} parent=1 // pred_check
      _
    $region7: #{tpu_custom_call.1} parent=1 // pred_check_branch
      %15 = sbr.rel (0) target = $region9
    $region8: #{tpu_custom_call.1} parent=1 // pred_region
      _
    $region9: #{tpu_custom_call.1} parent=1 // pred_fallthru
      _
    // Predicated region
    $region10: #{tpu_custom_call.1} parent=1 // pred_check
      _
    $region11: #{tpu_custom_call.1} parent=1 // pred_check_branch
      %17 = sbr.rel (0) target = $region13
    $region12: #{tpu_custom_call.1} parent=1 // pred_region
      _
    $region13: #{tpu_custom_call.1} parent=1 // pred_fallthru
      _
    %v18 = vld [vmem:[%s0] sm:$0xff]
    %v19 = vld [vmem:[%s0 + $0x8] sm:$0xff]
    %v20 = vld [vmem:[%s1] sm:$0xff]
    %v21 = vld [vmem:[%s1 + $0x8] sm:$0xff]
    %v22 = vld [vmem:[%s2] sm:$0x1]
    %v24 = vlaneseq
    %v25 = vshrl.u32 %v24, 7
    %v26 = vsub.s32 0, %v25
    %v27 = vrot.slane %v22, %v26
    %vm29 = vcmask 130048
    %v31 = vsel %vm29, %v18, 0
    %v34 = vsel %vm29, %v19, 0
    %36 = vmatprep.subr.mxu0 0.0
    %37 = vmatpush1.msra.mxu0 %v20
    %38 = vmatprep.subr.mxu0 0.0
    %39 = vmatpush1.msra.mxu0 %v21
    %40 = vmatprep.subr.mxu0 0.0
    %41 = vmatpush1.msra.mxu0 0.0
    %42 = vmatprep.subr.mxu0 0.0
    %43 = vmatpush1.msra.mxu0 0.0
    %44 = vmatprep.subr.mxu0 0.0
    %45 = vmatpush1.msra.mxu0 0.0
    %46 = vmatprep.subr.mxu0 0.0
    %47 = vmatpush1.msra.mxu0 0.0
    %48 = vmatprep.subr.mxu0 0.0
    %49 = vmatpush1.msra.mxu0 0.0
    %50 = vmatprep.subr.mxu0 0.0
    %51 = vmatpush1.msra.mxu0 0.0
    %52 = vmatprep.subr.mxu0 0.0
    %53 = vmatpush1.msra.mxu0 0.0
    %54 = vmatprep.subr.mxu0 0.0
    %55 = vmatpush1.msra.mxu0 0.0
    %56 = vmatprep.subr.mxu0 0.0
    %57 = vmatpush1.msra.mxu0 0.0
    %58 = vmatprep.subr.mxu0 0.0
    %59 = vmatpush1.msra.mxu0 0.0
    %60 = vmatprep.subr.mxu0 0.0
    %61 = vmatpush1.msra.mxu0 0.0
    %62 = vmatprep.subr.mxu0 0.0
    %63 = vmatpush1.msra.mxu0 0.0
    %64 = vmatprep.subr.mxu0 0.0
    %65 = vmatpush1.msra.mxu0 0.0
    %66 = vmatprep.subr.mxu0 0.0
    %67 = vmatpush1.msra.mxu0 0.0
    %68 = vmatprep.subr.mxu0 0.0
    %69 = vmatpush1.msra.mxu0 0.0
    %70 = vmatprep.subr.mxu0 0.0
    %71 = vmatpush1.msra.mxu0 0.0
    %72 = vmatprep.subr.mxu0 0.0
    %73 = vmatpush1.msra.mxu0 0.0
    %74 = vmatprep.subr.mxu0 0.0
    %75 = vmatpush1.msra.mxu0 0.0
    %76 = vmatprep.subr.mxu0 0.0
    %77 = vmatpush1.msra.mxu0 0.0
    %78 = vmatprep.subr.mxu0 0.0
    %79 = vmatpush1.msra.mxu0 0.0
    %80 = vmatprep.subr.mxu0 0.0
    %81 = vmatpush1.msra.mxu0 0.0
    %82 = vmatprep.subr.mxu0 0.0
    %83 = vmatpush1.msra.mxu0 0.0
    %84 = vmatprep.subr.mxu0 0.0
    %85 = vmatpush1.msra.mxu0 0.0
    %86 = vmatprep.subr.mxu0 0.0
    %87 = vmatpush1.msra.mxu0 0.0
    %88 = vmatprep.subr.mxu0 0.0
    %89 = vmatpush1.msra.mxu0 0.0
    %90 = vmatprep.subr.mxu0 0.0
    %91 = vmatpush1.msra.mxu0 0.0
    %92 = vmatprep.subr.mxu0 0.0
    %93 = vmatpush1.msra.mxu0 0.0
    %94 = vmatprep.subr.mxu0 0.0
    %95 = vmatpush1.msra.mxu0 0.0
    %96 = vmatprep.subr.mxu0 0.0
    %97 = vmatpush1.msra.mxu0 0.0
    %98 = vmatprep.subr.mxu0 0.0
    %99 = vmatpush1.msra.mxu0 0.0
    %100 = vmatprep.mubr.f32.mxu0 0.0
    %101 = vmatmul.mubr.f32.gmra.mrb[0].mxu0 %v31
    %v102 = vpop.f32.mrb[0].mxu0
    %v103 = vadd.f32 %v27, %v102
    %v104 = vpop.f32.mrb[0].mxu0
    %105 = vmatprep.mubr.f32.mxu0 0.0
    %106 = vmatmul.mubr.f32.gmra.mrb[0].mxu0 %v34
    %v107 = vpop.f32.mrb[0].mxu0
    %v108 = vadd.f32 %v27, %v107
    %v109 = vpop.f32.mrb[0].mxu0
    %110 = vdwg.mxu0
    %v111 = vxor.u32 %v103, 2147483648
    %v112 = vxor.u32 %v108, 2147483648
    %v113 = vmul.f32 %v111, 1.442695
    %v114 = vpow.pop %v113
    %v115 = vmul.f32 %v112, 1.442695
    %v116 = vpow.pop %v115
    %v117 = vadd.f32 %v114, 1.0
    %v118 = vadd.f32 %v116, 1.0
    %v119 = vrcp.pop %v117
    %v120 = vmul.f32 1.0, %v119
    %v121 = vrcp.pop %v118
    %v122 = vmul.f32 1.0, %v121
    %vm123 = vcmask 64512
    %124 = vst.msk [vmem:[#allocation2] sm:$0xff] %vm123, %v120
    %125 = vst.msk [vmem:[#allocation2 + $0x8] sm:$0xff] %vm123, %v122
    %126 = vmatprep.subr.mxu0 0.0
    %127 = vmatpush1.xpose.msra.mxu0 %v31
    %128 = vmatprep.subr.mxu0 0.0
    %129 = vmatpush1.xpose.msra.mxu0 0.0
    %130 = vmatprep.subr.mxu0 0.0
    %131 = vmatpush1.xpose.msra.mxu0 0.0
    %132 = vmatprep.subr.mxu0 0.0
    %133 = vmatpush1.xpose.msra.mxu0 0.0
    %134 = vmatprep.subr.mxu0 0.0
    %135 = vmatpush1.xpose.msra.mxu0 0.0
    %136 = vmatprep.subr.mxu0 0.0
    %137 = vmatpush1.xpose.msra.mxu0 0.0
    %138 = vmatprep.subr.mxu0 0.0
    %139 = vmatpush1.xpose.msra.mxu0 0.0
    %140 = vmatprep.subr.mxu0 0.0
    %141 = vmatpush1.xpose.msra.mxu0 0.0
    %142 = vmatprep.subr.mxu0 0.0
    %143 = vmatpush1.xpose.msra.mxu0 0.0
    %144 = vmatprep.subr.mxu0 0.0
    %145 = vmatpush1.xpose.msra.mxu0 0.0
    %146 = vmatprep.subr.mxu0 0.0
    %147 = vmatpush1.xpose.msra.mxu0 0.0
    %148 = vmatprep.subr.mxu0 0.0
    %149 = vmatpush1.xpose.msra.mxu0 0.0
    %150 = vmatprep.subr.mxu0 0.0
    %151 = vmatpush1.xpose.msra.mxu0 0.0
    %152 = vmatprep.subr.mxu0 0.0
    %153 = vmatpush1.xpose.msra.mxu0 0.0
    %154 = vmatprep.subr.mxu0 0.0
    %155 = vmatpush1.xpose.msra.mxu0 0.0
    %156 = vmatprep.subr.mxu0 0.0
    %157 = vmatpush1.xpose.msra.mxu0 0.0
    %158 = vmatprep.subr.mxu0 0.0
    %159 = vmatpush1.xpose.msra.mxu0 0.0
    %160 = vmatprep.subr.mxu0 0.0
    %161 = vmatpush1.xpose.msra.mxu0 0.0
    %162 = vmatprep.subr.mxu0 0.0
    %163 = vmatpush1.xpose.msra.mxu0 0.0
    %164 = vmatprep.subr.mxu0 0.0
    %165 = vmatpush1.xpose.msra.mxu0 0.0
    %166 = vmatprep.subr.mxu0 0.0
    %167 = vmatpush1.xpose.msra.mxu0 0.0
    %168 = vmatprep.subr.mxu0 0.0
    %169 = vmatpush1.xpose.msra.mxu0 0.0
    %170 = vmatprep.subr.mxu0 0.0
    %171 = vmatpush1.xpose.msra.mxu0 0.0
    %172 = vmatprep.subr.mxu0 0.0
    %173 = vmatpush1.xpose.msra.mxu0 0.0
    %174 = vmatprep.subr.mxu0 0.0
    %175 = vmatpush1.xpose.msra.mxu0 0.0
    %176 = vmatprep.subr.mxu0 0.0
    %177 = vmatpush1.xpose.msra.mxu0 0.0
    %178 = vmatprep.subr.mxu0 0.0
    %179 = vmatpush1.xpose.msra.mxu0 0.0
    %180 = vmatprep.subr.mxu0 0.0
    %181 = vmatpush1.xpose.msra.mxu0 0.0
    %182 = vmatprep.subr.mxu0 0.0
    %183 = vmatpush1.xpose.msra.mxu0 0.0
    %184 = vmatprep.subr.mxu0 0.0
    %185 = vmatpush1.xpose.msra.mxu0 0.0
    %186 = vmatprep.subr.mxu0 0.0
    %187 = vmatpush1.xpose.msra.mxu0 0.0
    %188 = vmatprep.subr.mxu0 0.0
    %189 = vmatpush1.xpose.msra.mxu0 0.0
    %190 = vmatprep.mubr.f32.mxu0 0.0
    %191 = vmatmul.mubr.f32.gmra.mrb[0].mxu0 %v31
    %v192 = vpop.f32.mrb[0].mxu0
    %v193 = vadd.f32 0.0, %v192
    %v194 = vpop.f32.mrb[0].mxu0
    %195 = vdwg.mxu0
    %196 = vmatprep.subr.mxu0 0.0
    %197 = vmatpush1.xpose.msra.mxu0 %v34
    %198 = vmatprep.subr.mxu0 0.0
    %199 = vmatpush1.xpose.msra.mxu0 0.0
    %200 = vmatprep.subr.mxu0 0.0
    %201 = vmatpush1.xpose.msra.mxu0 0.0
    %202 = vmatprep.subr.mxu0 0.0
    %203 = vmatpush1.xpose.msra.mxu0 0.0
    %204 = vmatprep.subr.mxu0 0.0
    %205 = vmatpush1.xpose.msra.mxu0 0.0
    %206 = vmatprep.subr.mxu0 0.0
    %207 = vmatpush1.xpose.msra.mxu0 0.0
    %208 = vmatprep.subr.mxu0 0.0
    %209 = vmatpush1.xpose.msra.mxu0 0.0
    %210 = vmatprep.subr.mxu0 0.0
    %211 = vmatpush1.xpose.msra.mxu0 0.0
    %212 = vmatprep.subr.mxu0 0.0
    %213 = vmatpush1.xpose.msra.mxu0 0.0
    %214 = vmatprep.subr.mxu0 0.0
    %215 = vmatpush1.xpose.msra.mxu0 0.0
    %216 = vmatprep.subr.mxu0 0.0
    %217 = vmatpush1.xpose.msra.mxu0 0.0
    %218 = vmatprep.subr.mxu0 0.0
    %219 = vmatpush1.xpose.msra.mxu0 0.0
    %220 = vmatprep.subr.mxu0 0.0
    %221 = vmatpush1.xpose.msra.mxu0 0.0
    %222 = vmatprep.subr.mxu0 0.0
    %223 = vmatpush1.xpose.msra.mxu0 0.0
    %224 = vmatprep.subr.mxu0 0.0
    %225 = vmatpush1.xpose.msra.mxu0 0.0
    %226 = vmatprep.subr.mxu0 0.0
    %227 = vmatpush1.xpose.msra.mxu0 0.0
    %228 = vmatprep.subr.mxu0 0.0
    %229 = vmatpush1.xpose.msra.mxu0 0.0
    %230 = vmatprep.subr.mxu0 0.0
    %231 = vmatpush1.xpose.msra.mxu0 0.0
    %232 = vmatprep.subr.mxu0 0.0
    %233 = vmatpush1.xpose.msra.mxu0 0.0
    %234 = vmatprep.subr.mxu0 0.0
    %235 = vmatpush1.xpose.msra.mxu0 0.0
    %236 = vmatprep.subr.mxu0 0.0
    %237 = vmatpush1.xpose.msra.mxu0 0.0
    %238 = vmatprep.subr.mxu0 0.0
    %239 = vmatpush1.xpose.msra.mxu0 0.0
    %240 = vmatprep.subr.mxu0 0.0
    %241 = vmatpush1.xpose.msra.mxu0 0.0
    %242 = vmatprep.subr.mxu0 0.0
    %243 = vmatpush1.xpose.msra.mxu0 0.0
    %244 = vmatprep.subr.mxu0 0.0
    %245 = vmatpush1.xpose.msra.mxu0 0.0
    %246 = vmatprep.subr.mxu0 0.0
    %247 = vmatpush1.xpose.msra.mxu0 0.0
    %248 = vmatprep.subr.mxu0 0.0
    %249 = vmatpush1.xpose.msra.mxu0 0.0
    %250 = vmatprep.subr.mxu0 0.0
    %251 = vmatpush1.xpose.msra.mxu0 0.0
    %252 = vmatprep.subr.mxu0 0.0
    %253 = vmatpush1.xpose.msra.mxu0 0.0
    %254 = vmatprep.subr.mxu0 0.0
    %255 = vmatpush1.xpose.msra.mxu0 0.0
    %256 = vmatprep.subr.mxu0 0.0
    %257 = vmatpush1.xpose.msra.mxu0 0.0
    %258 = vmatprep.subr.mxu0 0.0
    %259 = vmatpush1.xpose.msra.mxu0 0.0
    %260 = vmatprep.mubr.f32.mxu0 0.0
    %261 = vmatmul.mubr.f32.gmra.mrb[0].mxu0 %v34
    %v262 = vpop.f32.mrb[0].mxu0
    %v263 = vadd.f32 0.0, %v262
    %v264 = vpop.f32.mrb[0].mxu0
    %265 = vdwg.mxu0
    %v266 = vxor.u32 %v193, 2147483648
    %v267 = vxor.u32 %v263, 2147483648
    %v268 = vmul.f32 %v266, 1.442695
    %v269 = vpow.pop %v268
    %v270 = vmul.f32 %v267, 1.442695
    %v271 = vpow.pop %v270
    %v272 = vadd.f32 %v269, 1.0
    %v273 = vadd.f32 %v271, 1.0
    %v274 = vrcp.pop %v272
    %v275 = vmul.f32 1.0, %v274
    %v276 = vrcp.pop %v273
    %v277 = vmul.f32 1.0, %v276
    %278 = vst.msk [vmem:[#allocation4] sm:$0xff] %vm123, %v275
    %279 = vst.msk [vmem:[#allocation4 + $0x8] sm:$0xff] %vm123, %v277
    // Predicated region
    $region14: #{tpu_custom_call.1} parent=1 // pred_check
      _
    $region15: #{tpu_custom_call.1} parent=1 // pred_check_branch
      %281 = sbr.rel (0) target = $region17
    $region16: #{tpu_custom_call.1} parent=1 // pred_region
      %s283 = ssub.s32 256, 256
      %284 = vsyncadd [#allocation3], %s283
      %s285 = sshll.u32 [#allocation2], 4
      %s286 = int_to_ptr.vmem [resolvable:$true] %s285
      %291 = dma.vmem_to_hbm [thread:$0]  %s286, 256, %s3, [#allocation3], 128, 128, 8
    $region17: #{tpu_custom_call.1} parent=1 // pred_fallthru
      _
    // Predicated region
    $region18: #{tpu_custom_call.1} parent=1 // pred_check
      _
    $region19: #{tpu_custom_call.1} parent=1 // pred_check_branch
      %293 = sbr.rel (0) target = $region21
    $region20: #{tpu_custom_call.1} parent=1 // pred_region
      %s295 = ssub.s32 256, 256
      %296 = vsyncadd [#allocation5], %s295
      %s297 = sshll.u32 [#allocation4], 4
      %s298 = int_to_ptr.vmem [resolvable:$true] %s297
      %303 = dma.vmem_to_hbm [thread:$0]  %s298, 256, %s4, [#allocation5], 128, 128, 8
    $region21: #{tpu_custom_call.1} parent=1 // pred_fallthru
      _
    // Predicated region
    $region22: #{tpu_custom_call.1} parent=1 // pred_check
      _
    $region23: #{tpu_custom_call.1} parent=1 // pred_check_branch
      %305 = sbr.rel (0) target = $region25
    $region24: #{tpu_custom_call.1} parent=1 // pred_region
      %306 = dma.done [#allocation3], 256
    $region25: #{tpu_custom_call.1} parent=1 // pred_fallthru
      _
    // Predicated region
    $region26: #{tpu_custom_call.1} parent=1 // pred_check
      _
    $region27: #{tpu_custom_call.1} parent=1 // pred_check_branch
      %308 = sbr.rel (0) target = $region29
    $region28: #{tpu_custom_call.1} parent=1 // pred_region
      %309 = dma.done [#allocation5], 256
    $region29: #{tpu_custom_call.1} parent=1 // pred_fallthru
      _
    %310 = vsyncpa [#allocation3], 1
    %311 = vsyncpa [#allocation5], 1

</llo_original>
